<compile_context>
chip_gen: v5e
topology: v5e:2x2
jax: 0.10.0
libtpu: 0.0.40
codegen_flags: <defaults>
</compile_context>

<pallas_src>
import functools

import jax
import jax.numpy as jnp
from jax import lax
from jax.experimental import pallas as pl
from jax.experimental.pallas import tpu as pltpu

LANES = 128
SUBLANES = 8
MAX_BLOCK_ROWS = 1024  # 1024x128 f32 = 512 KiB per input per pipeline buffer


def _round_up(x, m):
    return (x + m - 1) // m * m


def _bce_kernel(yhat_ref, y_ref, out_ref, acc_ref, *,
                block_rows, tiles_per_split, n_real, need_mask):
    i = pl.program_id(1)  # reduction axis ("arbitrary")

    @pl.when(i == 0)
    def _():
        acc_ref[...] = jnp.zeros_like(acc_ref)

    yh = yhat_ref[...]
    yy = y_ref[...]

    neg_hundred = jnp.float32(-100.0)
    log_yh = jnp.maximum(jnp.log(yh), neg_hundred)
    log_1m = jnp.maximum(jnp.log(1.0 - yh), neg_hundred)
    # -(y*log(yh) + (1-y)*log(1-yh)) == -(log_1m + y*(log_yh - log_1m))
    per_elem = -(log_1m + yy * (log_yh - log_1m))

    if need_mask:
        # Mask out lane/row tail overreads (and any fully-out-of-range block
        # from an uneven 2-way split) by comparing the flat element index.
        c = pl.program_id(0)
        row0 = (c * tiles_per_split + i) * block_rows
        row_ids = lax.broadcasted_iota(jnp.int32, (block_rows, LANES), 0)
        col_ids = lax.broadcasted_iota(jnp.int32, (block_rows, LANES), 1)
        flat = (row0 + row_ids) * LANES + col_ids
        per_elem = jnp.where(flat < n_real, per_elem, 0.0)

    # VPU-only partial reduce: fold groups of 8 rows into the (8,128) accumulator.
    acc_ref[...] += per_elem.reshape(
        block_rows // SUBLANES, SUBLANES, LANES).sum(axis=0)

    # Emit this split's per-lane partial sums once, on the last reduction step.
    @pl.when(i == pl.num_programs(1) - 1)
    def _():
        out_ref[0, :, :] = acc_ref[...]


def bce_loss(yhat, y):
    """Mean BCE loss, matching torch.nn.BCELoss()(yhat, y)."""
    assert yhat.shape == y.shape
    n_real = int(yhat.size)

    yh_flat = jnp.ravel(yhat).astype(jnp.float32)
    y_flat = jnp.ravel(y).astype(jnp.float32)

    # Minimal pad (<128 elems) only when the element count is not
    # lane-divisible; padded elements are masked in-kernel so values don't matter.
    n_lane = _round_up(n_real, LANES)
    if n_lane != n_real:
        pad = n_lane - n_real
        yh_flat = jnp.pad(yh_flat, (0, pad), constant_values=0.5)
        y_flat = jnp.pad(y_flat, (0, pad), constant_values=0.5)

    rows = n_lane // LANES
    yh2d = yh_flat.reshape(rows, LANES)
    y2d = y_flat.reshape(rows, LANES)

    # Big tiles; small inputs collapse to a single grid step.
    block_rows = min(MAX_BLOCK_ROWS, _round_up(rows, SUBLANES))
    n_tiles = -(-rows // block_rows)

    # 2-way split of the reduction (v7x has 2 TensorCores; on 1-TC chips the
    # extra outer iteration is just one more sequential step).
    num_splits = 2 if n_tiles >= 2 else 1
    tiles_per_split = -(-n_tiles // num_splits)

    covered = num_splits * tiles_per_split * block_rows * LANES
    need_mask = covered > n_real

    if num_splits * tiles_per_split > n_tiles:
        # Clamp so no grid step DMAs a fully out-of-bounds block; duplicated
        # reads are fully masked, so they contribute nothing.
        def in_map(c, i):
            return (jnp.minimum(c * tiles_per_split + i, n_tiles - 1), 0)
    else:
        def in_map(c, i):
            return (c * tiles_per_split + i, 0)

    kernel = functools.partial(
        _bce_kernel,
        block_rows=block_rows,
        tiles_per_split=tiles_per_split,
        n_real=n_real,
        need_mask=need_mask,
    )

    partials = pl.pallas_call(
        kernel,
        out_shape=jax.ShapeDtypeStruct(
            (num_splits, SUBLANES, LANES), jnp.float32),
        grid_spec=pltpu.PrefetchScalarGridSpec(
            num_scalar_prefetch=0,
            grid=(num_splits, tiles_per_split),
            in_specs=[
                pl.BlockSpec((block_rows, LANES), in_map),
                pl.BlockSpec((block_rows, LANES), in_map),
            ],
            out_specs=pl.BlockSpec((1, SUBLANES, LANES),
                                   lambda c, i: (c, 0, 0)),
            scratch_shapes=[pltpu.VMEM((SUBLANES, LANES), jnp.float32)],
        ),
        compiler_params=pltpu.CompilerParams(
            dimension_semantics=("parallel", "arbitrary"),
        ),
    )(yh2d, y2d)

    # Final cross-lane reduce + mean over the real element count.
    return jnp.sum(partials) / jnp.float32(n_real)


def _bce_reference(yhat, y):
    log_yh = jnp.maximum(jnp.log(yhat), -100.0)
    log_1m = jnp.maximum(jnp.log(1.0 - yhat), -100.0)
    return jnp.mean(-(y * log_yh + (1.0 - y) * log_1m))


if __name__ == "__main__":
    key = jax.random.PRNGKey(0)

    # Primary test: small NCHW shape consistent with a segmentation-style BCE.
    shapes = [
        (2, 4, 16, 16),   # 2048 elems: single grid step, no masking
        (8, 8, 80, 80),   # 409600 elems: multi-tile, 2-way split, masked tail
        (3, 5, 7, 11),    # 1155 elems: not lane-divisible -> pad + mask path
    ]
    ok = True
    for shape in shapes:
        key, k1, k2 = jax.random.split(key, 3)
        yhat = jax.nn.sigmoid(jax.random.normal(k1, shape, dtype=jnp.float32))
        y = (jax.random.uniform(k2, shape) > 0.5).astype(jnp.float32)

        loss = bce_loss(yhat, y)
        jax.block_until_ready(loss)

        ref = _bce_reference(yhat, y)
        if not jnp.allclose(loss, ref, rtol=1e-5, atol=1e-6):
            ok = False
            print("MISMATCH", shape, float(loss), float(ref))

    assert ok
    print("KERNEL_OK")
</pallas_src>

<mosaic_0001>
module attributes {stable_mosaic.version = 11 : i64} {
  func.func @_bce_kernel(%arg0: i32, %arg1: i32, %arg2: memref<16x128xf32, #tpu.memory_space<vmem>>, %arg3: memref<16x128xf32, #tpu.memory_space<vmem>>, %arg4: memref<1x8x128xf32, #tpu.memory_space<vmem>>, %arg5: memref<8x128xf32, #tpu.memory_space<vmem>>) attributes {dimension_semantics = [#tpu.dimension_semantics<parallel>, #tpu.dimension_semantics<arbitrary>], iteration_bounds = array<i64: 1, 1>, scalar_prefetch = 0 : i64, scratch_operands = 1 : i64, tpu.core_type = #tpu.core_type<tc>, window_params = [{transform_indices = @transform_0, window_bounds = array<i64: 16, 128>}, {transform_indices = @transform_1, window_bounds = array<i64: 16, 128>}, {transform_indices = @transform_2, window_bounds = array<i64: 1, 8, 128>}]} {
    %c0_i32 = arith.constant 0 : i32
    %0 = arith.cmpi eq, %arg1, %c0_i32 : i32
    %1 = arith.extui %0 : i1 to i32
    %c0_i32_0 = arith.constant 0 : i32
    %2 = arith.cmpi ne, %1, %c0_i32_0 : i32
    scf.if %2 {
      %cst_14 = arith.constant 0.000000e+00 : f32
      %26 = vector.broadcast %cst_14 : f32 to vector<8x128xf32>
      %c0_15 = arith.constant 0 : index
      %c0_16 = arith.constant 0 : index
      %27 = vector.load %arg5[%c0_15, %c0_16] : memref<8x128xf32, #tpu.memory_space<vmem>>, vector<8x128xf32>
      tpu.vector_store %arg5[%c0_15, %c0_16], %26 {strides = array<i32>} : memref<8x128xf32, #tpu.memory_space<vmem>>, vector<8x128xf32>,
    } else {
    }
    %c0 = arith.constant 0 : index
    %c0_1 = arith.constant 0 : index
    %3 = vector.load %arg2[%c0, %c0_1] : memref<16x128xf32, #tpu.memory_space<vmem>>, vector<16x128xf32>
    %c0_2 = arith.constant 0 : index
    %c0_3 = arith.constant 0 : index
    %4 = vector.load %arg3[%c0_2, %c0_3] : memref<16x128xf32, #tpu.memory_space<vmem>>, vector<16x128xf32>
    %5 = math.log %3 : vector<16x128xf32>
    %cst = arith.constant -1.000000e+02 : f32
    %6 = vector.broadcast %cst : f32 to vector<16x128xf32>
    %7 = arith.maximumf %5, %6 : vector<16x128xf32>
    %cst_4 = arith.constant 1.000000e+00 : f32
    %8 = vector.broadcast %cst_4 : f32 to vector<16x128xf32>
    %9 = arith.subf %8, %3 : vector<16x128xf32>
    %10 = math.log %9 : vector<16x128xf32>
    %cst_5 = arith.constant -1.000000e+02 : f32
    %11 = vector.broadcast %cst_5 : f32 to vector<16x128xf32>
    %12 = arith.maximumf %10, %11 : vector<16x128xf32>
    %13 = arith.subf %7, %12 : vector<16x128xf32>
    %14 = arith.mulf %4, %13 : vector<16x128xf32>
    %15 = arith.addf %12, %14 : vector<16x128xf32>
    %cst_6 = arith.constant 0.000000e+00 : f32
    %16 = vector.broadcast %cst_6 : f32 to vector<16x128xf32>
    %17 = arith.subf %16, %15 : vector<16x128xf32>
    %c0_7 = arith.constant 0 : index
    %c0_8 = arith.constant 0 : index
    %18 = vector.load %arg5[%c0_7, %c0_8] : memref<8x128xf32, #tpu.memory_space<vmem>>, vector<8x128xf32>
    %19 = vector.shape_cast %17 : vector<16x128xf32> to vector<2x8x128xf32>
    %cst_9 = arith.constant dense<0.000000e+00> : vector<8x128xf32>
    %20 = vector.multi_reduction <add>, %19, %cst_9 [0] : vector<2x8x128xf32> to vector<8x128xf32>
    %21 = arith.addf %18, %20 : vector<8x128xf32>
    %c0_10 = arith.constant 0 : index
    %c0_11 = arith.constant 0 : index
    %22 = vector.load %arg5[%c0_10, %c0_11] : memref<8x128xf32, #tpu.memory_space<vmem>>, vector<8x128xf32>
    tpu.vector_store %arg5[%c0_10, %c0_11], %21 {strides = array<i32>} : memref<8x128xf32, #tpu.memory_space<vmem>>, vector<8x128xf32>,
    %c0_i32_12 = arith.constant 0 : i32
    %23 = arith.cmpi eq, %arg1, %c0_i32_12 : i32
    %24 = arith.extui %23 : i1 to i32
    %c0_i32_13 = arith.constant 0 : i32
    %25 = arith.cmpi ne, %24, %c0_i32_13 : i32
    scf.if %25 {
      %c0_14 = arith.constant 0 : index
      %c0_15 = arith.constant 0 : index
      %26 = vector.load %arg5[%c0_14, %c0_15] : memref<8x128xf32, #tpu.memory_space<vmem>>, vector<8x128xf32>
      %c0_16 = arith.constant 0 : index
      %c0_17 = arith.constant 0 : index
      %c0_18 = arith.constant 0 : index
      %27 = vector.load %arg4[%c0_16, %c0_17, %c0_18] : memref<1x8x128xf32, #tpu.memory_space<vmem>>, vector<1x8x128xf32>
      %28 = vector.shape_cast %27 : vector<1x8x128xf32> to vector<8x128xf32>
      %29 = vector.shape_cast %26 : vector<8x128xf32> to vector<1x8x128xf32>
      tpu.vector_store %arg4[%c0_16, %c0_17, %c0_18], %29 {strides = array<i32>} : memref<1x8x128xf32, #tpu.memory_space<vmem>>, vector<1x8x128xf32>,
    } else {
    }
    return
  }
  func.func @transform_0(%arg0: i32, %arg1: i32) -> (i32, i32) {
    %c1_i32 = arith.constant 1 : i32
    %0 = arith.muli %arg0, %c1_i32 : i32
    %1 = arith.addi %0, %arg1 : i32
    %c0_i32 = arith.constant 0 : i32
    %c0_i32_0 = arith.constant 0 : i32
    return %1, %c0_i32 : i32, i32
  }
  func.func @transform_1(%arg0: i32, %arg1: i32) -> (i32, i32) {
    %c1_i32 = arith.constant 1 : i32
    %0 = arith.muli %arg0, %c1_i32 : i32
    %1 = arith.addi %0, %arg1 : i32
    %c0_i32 = arith.constant 0 : i32
    %c0_i32_0 = arith.constant 0 : i32
    return %1, %c0_i32 : i32, i32
  }
  func.func @transform_2(%arg0: i32, %arg1: i32) -> (i32, i32, i32) {
    %c0_i32 = arith.constant 0 : i32
    %c0_i32_0 = arith.constant 0 : i32
    %c0_i32_1 = arith.constant 0 : i32
    return %arg0, %c0_i32, %c0_i32_0 : i32, i32, i32
  }
}

</mosaic_0001>

<llo_original>
// kernel: tpu_custom_call.1
$region0: #{tpu_custom_call.1}
  #allocation0 [shape = 'u32[]', space=smem, size = 0x4, offset = 0x4, fixed_abs, tag = 'smem constant byte address 0x4 - core index']
  #allocation1 [shape = 'u32[72,128]{1,0:T(1,128)}', space=vmem, size = 0x9000, scoped, tag = 'internal scratch']
  #allocation2 [shape = 'f32[8,128]{1,0:T(8,128)}', space=vmem, size = 0x1000, scoped, tag = 'scratch operand']
  %s0 = inlined_call_operand.hbm [shape: f32[16,128], index: 0, kind: input, shape index: {}]
  %s1 = inlined_call_operand.hbm [shape: f32[16,128], index: 1, kind: input, shape index: {}]
  %s2 = inlined_call_operand.hbm [shape: f32[1,8,128], index: 2, kind: output, shape index: {}]
  %s3 = sld [smem:[#allocation0]]
  $region34: #{tpu_custom_call.1} parent=0
    _
  %s5 = ssub.s32 1, %s3
  %s6 = scalar_select 0, %s5, %s3
  $region1: #{tpu_custom_call.1} parent=0
    #allocation3 [shape = 'u8[8192]{0}', space=vmem, size = 0x2000, scoped, tag = 'input window, operand 0, single buffered']
    #allocation4 [shape = 's32[1]{0}', space=sflag, size = 0x4, scoped, tag = 'scoped memory for tpu_custom_call.1']
    #allocation5 [shape = 's32[1]{0}', space=sflag, size = 0x4, scoped, tag = 'scoped memory for tpu_custom_call.1']
    #allocation6 [shape = 'u8[8192]{0}', space=vmem, size = 0x2000, scoped, tag = 'input window, operand 1, single buffered']
    #allocation7 [shape = 's32[1]{0}', space=sflag, size = 0x4, scoped, tag = 'scoped memory for tpu_custom_call.1']
    #allocation8 [shape = 'u8[4096]{0}', space=vmem, size = 0x1000, scoped, tag = 'output window, operand 0, single buffered']
    %7 = vsyncpa [#allocation4], 0
    %8 = vsyncpa [#allocation7], 0
    %9 = vsyncpa [#allocation5], 0
    // Predicated region
    $region2: #{tpu_custom_call.1} parent=1 // pred_check
      _
    $region3: #{tpu_custom_call.1} parent=1 // pred_check_branch
      %11 = sbr.rel (0) target = $region5
    $region4: #{tpu_custom_call.1} parent=1 // pred_region
      %s12 = sadd.s32 0, 0
      %s13 = smul.u32 2, %s12
      %15 = vsyncadd [#allocation4], 0
      %s16 = smul.addr %s13, 8
      %s17 = scalar_lea.hbm %s0, %s16
      %s18 = sshll.u32 %s17, 4
      %s19 = int_to_ptr.hbm [resolvable:$true] %s18
      %s20 = sshll.u32 [#allocation3], 4
      %s21 = int_to_ptr.vmem [resolvable:$true] %s20
      %26 = dma.hbm_to_vmem [thread:$0]  %s19, 256, %s21, [#allocation4], 128, 128, 8
    $region5: #{tpu_custom_call.1} parent=1 // pred_fallthru
      _
    // Predicated region
    $region6: #{tpu_custom_call.1} parent=1 // pred_check
      _
    $region7: #{tpu_custom_call.1} parent=1 // pred_check_branch
      %28 = sbr.rel (0) target = $region9
    $region8: #{tpu_custom_call.1} parent=1 // pred_region
      %s29 = sadd.s32 0, 0
      %s30 = smul.u32 2, %s29
      %32 = vsyncadd [#allocation7], 0
      %s33 = smul.addr %s30, 8
      %s34 = scalar_lea.hbm %s1, %s33
      %s35 = sshll.u32 %s34, 4
      %s36 = int_to_ptr.hbm [resolvable:$true] %s35
      %s37 = sshll.u32 [#allocation6], 4
      %s38 = int_to_ptr.vmem [resolvable:$true] %s37
      %43 = dma.hbm_to_vmem [thread:$0]  %s36, 256, %s38, [#allocation7], 128, 128, 8
    $region9: #{tpu_custom_call.1} parent=1 // pred_fallthru
      _
    // Predicated region
    $region10: #{tpu_custom_call.1} parent=1 // pred_check
      _
    $region11: #{tpu_custom_call.1} parent=1 // pred_check_branch
      %45 = sbr.rel (0) target = $region13
    $region12: #{tpu_custom_call.1} parent=1 // pred_region
      %47 = dma.done [#allocation4], 256
    $region13: #{tpu_custom_call.1} parent=1 // pred_fallthru
      _
    // Predicated region
    $region14: #{tpu_custom_call.1} parent=1 // pred_check
      _
    $region15: #{tpu_custom_call.1} parent=1 // pred_check_branch
      %49 = sbr.rel (0) target = $region17
    $region16: #{tpu_custom_call.1} parent=1 // pred_region
      %51 = dma.done [#allocation7], 256
    $region17: #{tpu_custom_call.1} parent=1 // pred_fallthru
      _
    %s52 = sadd.s32 0, 0
    %s53 = smul.u32 2, %s52
    %s54 = sadd.s32 0, 0
    %s55 = smul.u32 2, %s54
    %p56 = scmp.eq.s32.totalorder 0, 0
    // Predicated region
    $region18: #{tpu_custom_call.1} parent=1 // pred_check
      %p57 = pneg %p56
    $region19: #{tpu_custom_call.1} parent=1 // pred_check_branch
      %59 = sbr.rel (%p57) target = $region21
    $region20: #{tpu_custom_call.1} parent=1 // pred_region
      %60 = vst [vmem:[#allocation2] sm:$0xff] 0.0
    $region21: #{tpu_custom_call.1} parent=1 // pred_fallthru
      _
    %v61 = vld [vmem:[#allocation3] sm:$0xff]
    %v62 = vld [vmem:[#allocation3 + $0x8] sm:$0xff]
    %v63 = vld [vmem:[#allocation6] sm:$0xff]
    %v64 = vld [vmem:[#allocation6 + $0x8] sm:$0xff]
    %v65 = vlog2.pop %v61
    %v66 = vmul.f32 %v65, 0.6931472
    %v67 = vlog2.pop %v62
    %v68 = vmul.f32 %v67, 0.6931472
    %v69 = vmax.f32 %v66, -100.0
    %v70 = vmax.f32 %v68, -100.0
    %v71 = vsub.f32 1.0, %v61
    %v72 = vsub.f32 1.0, %v62
    %v73 = vlog2.pop %v71
    %v74 = vmul.f32 %v73, 0.6931472
    %v75 = vlog2.pop %v72
    %v76 = vmul.f32 %v75, 0.6931472
    %v77 = vmax.f32 %v74, -100.0
    %v78 = vmax.f32 %v76, -100.0
    %v79 = vsub.f32 %v69, %v77
    %v80 = vsub.f32 %v70, %v78
    %v81 = vmul.f32 %v63, %v79
    %v82 = vmul.f32 %v64, %v80
    %v83 = vadd.f32 %v77, %v81
    %v84 = vadd.f32 %v78, %v82
    %v85 = vsub.f32 0.0, %v83
    %v86 = vsub.f32 0.0, %v84
    %v87 = vld [vmem:[#allocation2] sm:$0xff]
    %v88 = vadd.f32 %v85, %v86
    %v89 = vadd.f32 %v87, %v88
    %90 = vst [vmem:[#allocation2] sm:$0xff] %v89
    // Predicated region
    $region22: #{tpu_custom_call.1} parent=1 // pred_check
      %p91 = pneg %p56
    $region23: #{tpu_custom_call.1} parent=1 // pred_check_branch
      %93 = sbr.rel (%p91) target = $region25
    $region24: #{tpu_custom_call.1} parent=1 // pred_region
      %v94 = vld [vmem:[#allocation2] sm:$0xff]
      %95 = vst [vmem:[#allocation8] sm:$0xff] %v94
    $region25: #{tpu_custom_call.1} parent=1 // pred_fallthru
      _
    // Predicated region
    $region26: #{tpu_custom_call.1} parent=1 // pred_check
      _
    $region27: #{tpu_custom_call.1} parent=1 // pred_check_branch
      %97 = sbr.rel (0) target = $region29
    $region28: #{tpu_custom_call.1} parent=1 // pred_region
      %99 = vsyncadd [#allocation5], 0
      %s101 = sshll.u32 [#allocation8], 4
      %s102 = int_to_ptr.vmem [resolvable:$true] %s101
      %s103 = sshll.u32 %s2, 4
      %s104 = int_to_ptr.hbm [resolvable:$true] %s103
      %106 = dma.vmem_to_hbm [thread:$0]  %s102, 128, %s104, [#allocation5]
    $region29: #{tpu_custom_call.1} parent=1 // pred_fallthru
      _
    // Predicated region
    $region30: #{tpu_custom_call.1} parent=1 // pred_check
      _
    $region31: #{tpu_custom_call.1} parent=1 // pred_check_branch
      %108 = sbr.rel (0) target = $region33
    $region32: #{tpu_custom_call.1} parent=1 // pred_region
      %110 = dma.done [#allocation5], 128
    $region33: #{tpu_custom_call.1} parent=1 // pred_fallthru
      _
    %111 = vsyncpa [#allocation4], 1
    %112 = vsyncpa [#allocation7], 1
    %113 = vsyncpa [#allocation5], 1

</llo_original>
